<compile_context>
chip_gen: v7x
topology: tpu7x:2x2x1
jax: 0.10.0
libtpu: 0.0.40
codegen_flags: <defaults>
</compile_context>

<pallas_src>
import jax
import jax.numpy as jnp
from jax.experimental import pallas as pl
from jax.experimental.pallas import tpu as pltpu


def mlp_kernel(x_ref, w1_ref, b1_ref, w2_ref, b2_ref, w3_ref, b3_ref, o_ref):
    x = x_ref[...]                                                    # (1, TM), batch on lanes
    # fc1 (in_features=1): VPU broadcast outer product, no K=1 MXU pass.
    h1 = jnp.maximum(w1_ref[...] * x + b1_ref[...], 0.0)             # (64, TM)
    # fc2: genuine MXU matmul, f32 accumulation.
    h2 = jnp.dot(w2_ref[...], h1, preferred_element_type=jnp.float32) + b2_ref[...]
    h2 = jnp.maximum(h2, 0.0)                                         # (32, TM)
    # fc3 (out_features=1): VPU multiply + sublane reduce; singleton stays off lanes.
    y = jnp.sum(w3_ref[...] * h2, axis=0, keepdims=True) + b3_ref[0]  # (1, TM)
    o_ref[...] = y.astype(o_ref.dtype)                                # lane-dense store


def mlp_forward(x, params, *, tm=2048):
    """x: (N, 1) float32 (torch-style batch-major). Returns (N, 1) float32."""
    N = x.shape[0]
    w1, b1, w2, b2, w3, b3 = (params[k] for k in ("w1", "b1", "w2", "b2", "w3", "b3"))

    # Lane-aligned batch tile. Large tiles amortize the ~0.35us/step overhead;
    # keep >=2 grid steps when the batch allows it (v7x dual-TensorCore sharding).
    tm = max(128, (tm // 128) * 128)
    tm = max(128, min(tm, pl.cdiv(N, 2 * 128) * 128))
    n_pad = pl.cdiv(N, tm) * tm

    # Transpose to feature-major: batch on the lane axis. Pad ragged batches with zeros.
    x_row = jnp.pad(x[:, 0], (0, n_pad - N)).reshape(1, n_pad)

    full = lambda shape: pl.BlockSpec(shape, lambda i: (0, 0))

    out = pl.pallas_call(
        mlp_kernel,
        out_shape=jax.ShapeDtypeStruct((1, n_pad), jnp.float32),
        grid_spec=pltpu.PrefetchScalarGridSpec(
            num_scalar_prefetch=0,
            grid=(n_pad // tm,),
            in_specs=[
                pl.BlockSpec((1, tm), lambda i: (0, i)),   # x tile (batch on lanes)
                full(w1.shape), full(b1.shape),            # (64,1), (64,1)
                full(w2.shape), full(b2.shape),            # (32,64), (32,1)
                full(w3.shape),                            # (32,1)
                pl.BlockSpec(memory_space=pltpu.MemorySpace.SMEM),  # b3 scalar
            ],
            out_specs=pl.BlockSpec((1, tm), lambda i: (0, i)),
        ),
        compiler_params=pltpu.CompilerParams(
            dimension_semantics=("parallel",),
        ),
    )(x_row, w1, b1, w2, b2, w3, b3)

    return out.reshape(n_pad, 1)[:N]


def init_params(key):
    """Deterministic init. Weights in torch (out, in) layout; fc3 weight stored as (32,1)."""
    k1, k2, k3, k4, k5, k6 = jax.random.split(key, 6)
    return {
        "w1": jax.random.normal(k1, (64, 1), jnp.float32) * 0.5,   # fc1.weight
        "b1": jax.random.normal(k2, (64, 1), jnp.float32) * 0.1,   # fc1.bias (column)
        "w2": jax.random.normal(k3, (32, 64), jnp.float32) * 0.1,  # fc2.weight
        "b2": jax.random.normal(k4, (32, 1), jnp.float32) * 0.1,   # fc2.bias (column)
        "w3": jax.random.normal(k5, (32, 1), jnp.float32) * 0.1,   # fc3.weight.T
        "b3": jax.random.normal(k6, (1,), jnp.float32) * 0.1,      # fc3.bias (SMEM scalar)
    }


def mlp_reference(x, p):
    h1 = jnp.maximum(x @ p["w1"].T + p["b1"].T, 0.0)   # (N, 64)
    h2 = jnp.maximum(h1 @ p["w2"].T + p["b2"].T, 0.0)  # (N, 32)
    return h2 @ p["w3"] + p["b3"]                       # (N, 1)


if __name__ == "__main__":
    key = jax.random.PRNGKey(0)
    pkey, xkey = jax.random.split(key)
    params = init_params(pkey)

    N = 256  # mirrors `x.reshape(-1, 1).astype(np.float32)`; small example batch
    x = jax.random.normal(xkey, (N, 1), jnp.float32)

    out = mlp_forward(x, params)          # tm clamps to 128 here -> 2 parallel grid steps
    out = jax.block_until_ready(out)

    ref = mlp_reference(x, params)
    assert out.shape == (N, 1)
    assert jnp.allclose(out, ref, atol=1e-4, rtol=1e-5), "mismatch vs reference"

    print("KERNEL_OK")
</pallas_src>

<mosaic_0001>
module attributes {stable_mosaic.version = 11 : i64} {
  func.func @mlp_kernel(%arg0: i32, %arg1: memref<1x128xf32, #tpu.memory_space<vmem>>, %arg2: memref<64x1xf32, #tpu.memory_space<vmem>>, %arg3: memref<64x1xf32, #tpu.memory_space<vmem>>, %arg4: memref<32x64xf32, #tpu.memory_space<vmem>>, %arg5: memref<32x1xf32, #tpu.memory_space<vmem>>, %arg6: memref<32x1xf32, #tpu.memory_space<vmem>>, %arg7: memref<1xf32, #tpu.memory_space<smem>>, %arg8: memref<1x128xf32, #tpu.memory_space<vmem>>) attributes {dimension_semantics = [#tpu.dimension_semantics<parallel>], iteration_bounds = array<i64: 2>, scalar_prefetch = 0 : i64, scratch_operands = 0 : i64, tpu.core_type = #tpu.core_type<tc>, window_params = [{transform_indices = @transform_0, window_bounds = array<i64: 1, 128>}, {pipeline_mode = #tpu.pipeline_mode<synchronous>, transform_indices = @transform_1, window_bounds = array<i64: 64, 1>}, {pipeline_mode = #tpu.pipeline_mode<synchronous>, transform_indices = @transform_2, window_bounds = array<i64: 64, 1>}, {pipeline_mode = #tpu.pipeline_mode<synchronous>, transform_indices = @transform_3, window_bounds = array<i64: 32, 64>}, {pipeline_mode = #tpu.pipeline_mode<synchronous>, transform_indices = @transform_4, window_bounds = array<i64: 32, 1>}, {pipeline_mode = #tpu.pipeline_mode<synchronous>, transform_indices = @transform_5, window_bounds = array<i64: 32, 1>}, {transform_indices = @transform_6, window_bounds = array<i64: 1>}, {transform_indices = @transform_7, window_bounds = array<i64: 1, 128>}]} {
    %c0 = arith.constant 0 : index
    %c0_0 = arith.constant 0 : index
    %0 = vector.load %arg1[%c0, %c0_0] : memref<1x128xf32, #tpu.memory_space<vmem>>, vector<1x128xf32>
    %c0_1 = arith.constant 0 : index
    %c0_2 = arith.constant 0 : index
    %1 = vector.load %arg2[%c0_1, %c0_2] : memref<64x1xf32, #tpu.memory_space<vmem>>, vector<64x1xf32>
    %2 = vector.broadcast %1 : vector<64x1xf32> to vector<64x128xf32>
    %3 = vector.broadcast %0 : vector<1x128xf32> to vector<64x128xf32>
    %4 = arith.mulf %2, %3 : vector<64x128xf32>
    %c0_3 = arith.constant 0 : index
    %c0_4 = arith.constant 0 : index
    %5 = vector.load %arg3[%c0_3, %c0_4] : memref<64x1xf32, #tpu.memory_space<vmem>>, vector<64x1xf32>
    %6 = vector.broadcast %5 : vector<64x1xf32> to vector<64x128xf32>
    %7 = arith.addf %4, %6 : vector<64x128xf32>
    %cst = arith.constant 0.000000e+00 : f32
    %8 = vector.broadcast %cst : f32 to vector<64x128xf32>
    %9 = arith.maximumf %7, %8 : vector<64x128xf32>
    %c0_5 = arith.constant 0 : index
    %c0_6 = arith.constant 0 : index
    %10 = vector.load %arg4[%c0_5, %c0_6] : memref<32x64xf32, #tpu.memory_space<vmem>>, vector<32x64xf32>
    %cst_7 = arith.constant dense<0.000000e+00> : vector<32x128xf32>
    %11 = tpu.matmul %10, %9, %cst_7 {dimension_numbers = #tpu.dot_dimension_numbers<[1], [0], [0], [1], [0, 0, 1, 1], [], []>} : vector<32x64xf32>, vector<64x128xf32>, vector<32x128xf32> -> vector<32x128xf32>
    %c0_8 = arith.constant 0 : index
    %c0_9 = arith.constant 0 : index
    %12 = vector.load %arg5[%c0_8, %c0_9] : memref<32x1xf32, #tpu.memory_space<vmem>>, vector<32x1xf32>
    %13 = vector.broadcast %12 : vector<32x1xf32> to vector<32x128xf32>
    %14 = arith.addf %11, %13 : vector<32x128xf32>
    %cst_10 = arith.constant 0.000000e+00 : f32
    %15 = vector.broadcast %cst_10 : f32 to vector<32x128xf32>
    %16 = arith.maximumf %14, %15 : vector<32x128xf32>
    %c0_11 = arith.constant 0 : index
    %c0_12 = arith.constant 0 : index
    %17 = vector.load %arg6[%c0_11, %c0_12] : memref<32x1xf32, #tpu.memory_space<vmem>>, vector<32x1xf32>
    %18 = vector.broadcast %17 : vector<32x1xf32> to vector<32x128xf32>
    %19 = arith.mulf %18, %16 : vector<32x128xf32>
    %cst_13 = arith.constant dense<0.000000e+00> : vector<128xf32>
    %20 = vector.multi_reduction <add>, %19, %cst_13 [0] : vector<32x128xf32> to vector<128xf32>
    %21 = vector.shape_cast %20 : vector<128xf32> to vector<1x128xf32>
    %c0_14 = arith.constant 0 : index
    %22 = memref.load %arg7[%c0_14] : memref<1xf32, #tpu.memory_space<smem>>
    %23 = vector.broadcast %22 : f32 to vector<1x128xf32>
    %24 = arith.addf %21, %23 : vector<1x128xf32>
    %c0_15 = arith.constant 0 : index
    %c0_16 = arith.constant 0 : index
    %25 = vector.load %arg8[%c0_15, %c0_16] : memref<1x128xf32, #tpu.memory_space<vmem>>, vector<1x128xf32>
    tpu.vector_store %arg8[%c0_15, %c0_16], %24 {strides = array<i32>} : memref<1x128xf32, #tpu.memory_space<vmem>>, vector<1x128xf32>,
    return
  }
  func.func @transform_0(%arg0: i32) -> (i32, i32) {
    %c0_i32 = arith.constant 0 : i32
    %c0_i32_0 = arith.constant 0 : i32
    return %c0_i32, %arg0 : i32, i32
  }
  func.func @transform_1(%arg0: i32) -> (i32, i32) {
    %c0_i32 = arith.constant 0 : i32
    %c0_i32_0 = arith.constant 0 : i32
    %c0_i32_1 = arith.constant 0 : i32
    return %c0_i32, %c0_i32_0 : i32, i32
  }
  func.func @transform_2(%arg0: i32) -> (i32, i32) {
    %c0_i32 = arith.constant 0 : i32
    %c0_i32_0 = arith.constant 0 : i32
    %c0_i32_1 = arith.constant 0 : i32
    return %c0_i32, %c0_i32_0 : i32, i32
  }
  func.func @transform_3(%arg0: i32) -> (i32, i32) {
    %c0_i32 = arith.constant 0 : i32
    %c0_i32_0 = arith.constant 0 : i32
    %c0_i32_1 = arith.constant 0 : i32
    return %c0_i32, %c0_i32_0 : i32, i32
  }
  func.func @transform_4(%arg0: i32) -> (i32, i32) {
    %c0_i32 = arith.constant 0 : i32
    %c0_i32_0 = arith.constant 0 : i32
    %c0_i32_1 = arith.constant 0 : i32
    return %c0_i32, %c0_i32_0 : i32, i32
  }
  func.func @transform_5(%arg0: i32) -> (i32, i32) {
    %c0_i32 = arith.constant 0 : i32
    %c0_i32_0 = arith.constant 0 : i32
    %c0_i32_1 = arith.constant 0 : i32
    return %c0_i32, %c0_i32_0 : i32, i32
  }
  func.func @transform_6(%arg0: i32) -> i32 {
    %c0_i32 = arith.constant 0 : i32
    %c0_i32_0 = arith.constant 0 : i32
    return %c0_i32 : i32
  }
  func.func @transform_7(%arg0: i32) -> (i32, i32) {
    %c0_i32 = arith.constant 0 : i32
    %c0_i32_0 = arith.constant 0 : i32
    return %c0_i32, %arg0 : i32, i32
  }
}

</mosaic_0001>

<llo_original>
// kernel: tpu_custom_call.1
$region0: #{tpu_custom_call.1}
  #allocation0 [shape = 'u32[]', space=smem, size = 0x4, offset = 0x4, fixed_abs, tag = 'smem constant byte address 0x4 - core index']
  #allocation1 [shape = 'u32[144,128]{1,0:T(1,128)}', space=vmem, size = 0x12000, scoped, tag = 'internal scratch']
  #allocation2 [shape = 'f32[1]{0:T(128)S(6)}', space=smem, size = 0x200, scoped, tag = 'scoped memory for tpu_custom_call.1']
  %s0 = inlined_call_operand.vmem [shape: f32[1,256], index: 0, kind: input, shape index: {}]
  %s1 = inlined_call_operand.vmem [shape: f32[64,1], index: 1, kind: input, shape index: {}]
  %s2 = inlined_call_operand.vmem [shape: f32[64,1], index: 2, kind: input, shape index: {}]
  %s3 = inlined_call_operand.vmem [shape: f32[32,64], index: 3, kind: input, shape index: {}]
  %s4 = inlined_call_operand.vmem [shape: f32[32,1], index: 4, kind: input, shape index: {}]
  %s5 = inlined_call_operand.vmem [shape: f32[32,1], index: 5, kind: input, shape index: {}]
  %s6 = inlined_call_operand.<no memory space> [shape: f32[1], index: 6, kind: input, shape index: {}]
  %s7 = inlined_call_operand.hbm [shape: f32[1,256], index: 7, kind: output, shape index: {}]
  %s8 = sld [smem:[#allocation0]]
  $region61: #{tpu_custom_call.1} parent=0
    _
  %s10 = ssub.s32 1, %s8
  %s11 = scalar_select 0, %s10, %s8
  %12 = sst [smem:[#allocation2]] %s6
  $region1: #{tpu_custom_call.1} parent=0
    #allocation3 [shape = 'u8[1024]{0}', space=vmem, size = 0x400, scoped, tag = 'output window, operand 0']
    #allocation4 [shape = 's32[2]{0}', space=sflag, size = 0x8, scoped, tag = 'scoped memory for tpu_custom_call.1']
    %13 = vsyncpa [#allocation4], 0
    %s14 = scalar_lea.sflag [#allocation4], 1
    %15 = vsyncpa %s14, 0
    loop: start=0, step=1, limit=4
    $region2: #{tpu_custom_call.1} parent=1 // loop_pre_header
      _
    $region3: #{tpu_custom_call.1} parent=1 // loop_header
      %s17 = sphi 0, %s21
      %p18 = scmp.ge.s32.totalorder %s17, 4
      %s27 = sphi 0, %s29
      %s30 = sphi 0, %s27
      %s31 = sphi 0, %s30
      %s47 = sphi 0, %s31
      %s51 = sphi 0, %s51
      %s53 = sphi 0, %s51
      %s54 = sphi 0, %s53
      %s68 = sphi 0, %s54
      %s72 = sphi 0, %s72
      %s74 = sphi 0, %s72
      %s75 = sphi 0, %s74
      %s89 = sphi 0, %s75
      %s93 = sphi 0, %s93
      %s95 = sphi 0, %s93
      %s96 = sphi 0, %s95
      %s110 = sphi 0, %s96
      %s114 = sphi 0, %s114
      %s116 = sphi 0, %s114
      %s117 = sphi 0, %s116
      %s131 = sphi 0, %s117
      %s135 = sphi 0, %s135
      %s137 = sphi 0, %s135
      %s138 = sphi 0, %s137
      %s152 = sphi 0, %s138
      %s156 = sphi 0, %s156
      %s158 = sphi 0, %s156
      %s159 = sphi 0, %s158
      %s173 = sphi 0, %s159
      %s179 = sphi 0, %s181
      %s182 = sphi 0, %s179
      %s183 = sphi 0, %s182
      %s199 = sphi 0, %s183
    $region4: #{tpu_custom_call.1} parent=1 // loop_header_branch
      %20 = sbr.rel (%p18) target = $region8
    $region5: #{tpu_custom_call.1} parent=1 // loop_body
      %s22 = ssub.s32 %s17, 1
      %s23 = ssub.s32 %s17, 2
      %s24 = sadd.s32 %s17, 1
      %s25 = ssub.s32 %s17, %s24
      %p26 = scmp.eq.s32.totalorder %s25, 0
      %s28 = sadd.s32 %s27, 1
      %s29 = scalar_select %p26, %s27, %s28
      %p32 = pneg %p26
      %p33 = scmp.eq.s32.totalorder %s17, 1
      %p34 = por %p32, %p33
      %p35 = scmp.ne.s32.totalorder %s27, %s30
      %p36 = scmp.eq.s32.totalorder %s17, 0
      %p37 = por %p35, %p36
      %p38 = scmp.ne.s32.totalorder %s27, %s30
      %p39 = scmp.eq.s32.totalorder %s22, 1
      %p40 = por %p38, %p39
      %p41 = scmp.ne.s32.totalorder %s30, %s31
      %p42 = scmp.eq.s32.totalorder %s22, 0
      %p43 = por %p41, %p42
      %p44 = scmp.ne.s32.totalorder %s30, %s31
      %p45 = scmp.eq.s32.totalorder %s23, 1
      %p46 = por %p44, %p45
      %p48 = scmp.ne.s32.totalorder %s31, %s47
      %p49 = scmp.eq.s32.totalorder %s23, 0
      %p50 = por %p48, %p49
      %s52 = sadd.s32 %s51, 1
      %p55 = scmp.eq.s32.totalorder %s17, 1
      %p56 = scmp.ne.s32.totalorder %s51, %s53
      %p57 = scmp.eq.s32.totalorder %s17, 0
      %p58 = por %p56, %p57
      %p59 = scmp.ne.s32.totalorder %s51, %s53
      %p60 = scmp.eq.s32.totalorder %s22, 1
      %p61 = por %p59, %p60
      %p62 = scmp.ne.s32.totalorder %s53, %s54
      %p63 = scmp.eq.s32.totalorder %s22, 0
      %p64 = por %p62, %p63
      %p65 = scmp.ne.s32.totalorder %s53, %s54
      %p66 = scmp.eq.s32.totalorder %s23, 1
      %p67 = por %p65, %p66
      %p69 = scmp.ne.s32.totalorder %s54, %s68
      %p70 = scmp.eq.s32.totalorder %s23, 0
      %p71 = por %p69, %p70
      %s73 = sadd.s32 %s72, 1
      %p76 = scmp.eq.s32.totalorder %s17, 1
      %p77 = scmp.ne.s32.totalorder %s72, %s74
      %p78 = scmp.eq.s32.totalorder %s17, 0
      %p79 = por %p77, %p78
      %p80 = scmp.ne.s32.totalorder %s72, %s74
      %p81 = scmp.eq.s32.totalorder %s22, 1
      %p82 = por %p80, %p81
      %p83 = scmp.ne.s32.totalorder %s74, %s75
      %p84 = scmp.eq.s32.totalorder %s22, 0
      %p85 = por %p83, %p84
      %p86 = scmp.ne.s32.totalorder %s74, %s75
      %p87 = scmp.eq.s32.totalorder %s23, 1
      %p88 = por %p86, %p87
      %p90 = scmp.ne.s32.totalorder %s75, %s89
      %p91 = scmp.eq.s32.totalorder %s23, 0
      %p92 = por %p90, %p91
      %s94 = sadd.s32 %s93, 1
      %p97 = scmp.eq.s32.totalorder %s17, 1
      %p98 = scmp.ne.s32.totalorder %s93, %s95
      %p99 = scmp.eq.s32.totalorder %s17, 0
      %p100 = por %p98, %p99
      %p101 = scmp.ne.s32.totalorder %s93, %s95
      %p102 = scmp.eq.s32.totalorder %s22, 1
      %p103 = por %p101, %p102
      %p104 = scmp.ne.s32.totalorder %s95, %s96
      %p105 = scmp.eq.s32.totalorder %s22, 0
      %p106 = por %p104, %p105
      %p107 = scmp.ne.s32.totalorder %s95, %s96
      %p108 = scmp.eq.s32.totalorder %s23, 1
      %p109 = por %p107, %p108
      %p111 = scmp.ne.s32.totalorder %s96, %s110
      %p112 = scmp.eq.s32.totalorder %s23, 0
      %p113 = por %p111, %p112
      %s115 = sadd.s32 %s114, 1
      %p118 = scmp.eq.s32.totalorder %s17, 1
      %p119 = scmp.ne.s32.totalorder %s114, %s116
      %p120 = scmp.eq.s32.totalorder %s17, 0
      %p121 = por %p119, %p120
      %p122 = scmp.ne.s32.totalorder %s114, %s116
      %p123 = scmp.eq.s32.totalorder %s22, 1
      %p124 = por %p122, %p123
      %p125 = scmp.ne.s32.totalorder %s116, %s117
      %p126 = scmp.eq.s32.totalorder %s22, 0
      %p127 = por %p125, %p126
      %p128 = scmp.ne.s32.totalorder %s116, %s117
      %p129 = scmp.eq.s32.totalorder %s23, 1
      %p130 = por %p128, %p129
      %p132 = scmp.ne.s32.totalorder %s117, %s131
      %p133 = scmp.eq.s32.totalorder %s23, 0
      %p134 = por %p132, %p133
      %s136 = sadd.s32 %s135, 1
      %p139 = scmp.eq.s32.totalorder %s17, 1
      %p140 = scmp.ne.s32.totalorder %s135, %s137
      %p141 = scmp.eq.s32.totalorder %s17, 0
      %p142 = por %p140, %p141
      %p143 = scmp.ne.s32.totalorder %s135, %s137
      %p144 = scmp.eq.s32.totalorder %s22, 1
      %p145 = por %p143, %p144
      %p146 = scmp.ne.s32.totalorder %s137, %s138
      %p147 = scmp.eq.s32.totalorder %s22, 0
      %p148 = por %p146, %p147
      %p149 = scmp.ne.s32.totalorder %s137, %s138
      %p150 = scmp.eq.s32.totalorder %s23, 1
      %p151 = por %p149, %p150
      %p153 = scmp.ne.s32.totalorder %s138, %s152
      %p154 = scmp.eq.s32.totalorder %s23, 0
      %p155 = por %p153, %p154
      %s157 = sadd.s32 %s156, 1
      %p160 = scmp.eq.s32.totalorder %s17, 1
      %p161 = scmp.ne.s32.totalorder %s156, %s158
      %p162 = scmp.eq.s32.totalorder %s17, 0
      %p163 = por %p161, %p162
      %p164 = scmp.ne.s32.totalorder %s156, %s158
      %p165 = scmp.eq.s32.totalorder %s22, 1
      %p166 = por %p164, %p165
      %p167 = scmp.ne.s32.totalorder %s158, %s159
      %p168 = scmp.eq.s32.totalorder %s22, 0
      %p169 = por %p167, %p168
      %p170 = scmp.ne.s32.totalorder %s158, %s159
      %p171 = scmp.eq.s32.totalorder %s23, 1
      %p172 = por %p170, %p171
      %p174 = scmp.ne.s32.totalorder %s159, %s173
      %p175 = scmp.eq.s32.totalorder %s23, 0
      %p176 = por %p174, %p175
      %s177 = ssub.s32 %s17, %s24
      %p178 = scmp.eq.s32.totalorder %s177, 0
      %s180 = sadd.s32 %s179, 1
      %s181 = scalar_select %p178, %s179, %s180
      %p184 = pneg %p178
      %p185 = scmp.eq.s32.totalorder %s17, 1
      %p186 = por %p184, %p185
      %p187 = scmp.ne.s32.totalorder %s179, %s182
      %p188 = scmp.eq.s32.totalorder %s17, 0
      %p189 = por %p187, %p188
      %p190 = scmp.ne.s32.totalorder %s179, %s182
      %p191 = scmp.eq.s32.totalorder %s22, 1
      %p192 = por %p190, %p191
      %p193 = scmp.ne.s32.totalorder %s182, %s183
      %p194 = scmp.eq.s32.totalorder %s22, 0
      %p195 = por %p193, %p194
      %p196 = scmp.ne.s32.totalorder %s182, %s183
      %p197 = scmp.eq.s32.totalorder %s23, 1
      %p198 = por %p196, %p197
      %p200 = scmp.ne.s32.totalorder %s183, %s199
      %p201 = scmp.eq.s32.totalorder %s23, 0
      %p202 = por %p200, %p201
      %p203 = scmp.le.s32.totalorder 1, %s17
      %p204 = scmp.lt.s32.totalorder %s17, 3
      %p205 = pnand %p203, %p204
      %p206 = pneg %p205
      // Predicated region
      $region9: #{tpu_custom_call.1} parent=5 // pred_check
        _
      $region10: #{tpu_custom_call.1} parent=5 // pred_check_branch
        %208 = sbr.rel (%p205) target = $region12
      $region11: #{tpu_custom_call.1} parent=5 // pred_region
        %s209 = ssub.s32 %s17, 1
        // Predicated region
        $region13: #{tpu_custom_call.1} parent=11 // pred_check
          %p210 = pneg %p64
        $region14: #{tpu_custom_call.1} parent=11 // pred_check_branch
          %212 = sbr.rel (%p210) target = $region16
        $region15: #{tpu_custom_call.1} parent=11 // pred_region
          _
        $region16: #{tpu_custom_call.1} parent=11 // pred_fallthru
          _
        // Predicated region
        $region17: #{tpu_custom_call.1} parent=11 // pred_check
          %p213 = pneg %p85
        $region18: #{tpu_custom_call.1} parent=11 // pred_check_branch
          %215 = sbr.rel (%p213) target = $region20
        $region19: #{tpu_custom_call.1} parent=11 // pred_region
          _
        $region20: #{tpu_custom_call.1} parent=11 // pred_fallthru
          _
        // Predicated region
        $region21: #{tpu_custom_call.1} parent=11 // pred_check
          %p216 = pneg %p106
        $region22: #{tpu_custom_call.1} parent=11 // pred_check_branch
          %218 = sbr.rel (%p216) target = $region24
        $region23: #{tpu_custom_call.1} parent=11 // pred_region
          _
        $region24: #{tpu_custom_call.1} parent=11 // pred_fallthru
          _
        // Predicated region
        $region25: #{tpu_custom_call.1} parent=11 // pred_check
          %p219 = pneg %p127
        $region26: #{tpu_custom_call.1} parent=11 // pred_check_branch
          %221 = sbr.rel (%p219) target = $region28
        $region27: #{tpu_custom_call.1} parent=11 // pred_region
          _
        $region28: #{tpu_custom_call.1} parent=11 // pred_fallthru
          _
        // Predicated region
        $region29: #{tpu_custom_call.1} parent=11 // pred_check
          %p222 = pneg %p148
        $region30: #{tpu_custom_call.1} parent=11 // pred_check_branch
          %224 = sbr.rel (%p222) target = $region32
        $region31: #{tpu_custom_call.1} parent=11 // pred_region
          _
        $region32: #{tpu_custom_call.1} parent=11 // pred_fallthru
          _
        // Predicated region
        $region33: #{tpu_custom_call.1} parent=11 // pred_check
          %p225 = pneg %p169
        $region34: #{tpu_custom_call.1} parent=11 // pred_check_branch
          %227 = sbr.rel (%p225) target = $region36
        $region35: #{tpu_custom_call.1} parent=11 // pred_region
          _
        $region36: #{tpu_custom_call.1} parent=11 // pred_fallthru
          _
      $region12: #{tpu_custom_call.1} parent=5 // pred_fallthru
        _
      %p228 = scmp.lt.s32.totalorder %s17, 2
      // Predicated region
      $region37: #{tpu_custom_call.1} parent=5 // pred_check
        %p229 = pneg %p228
      $region38: #{tpu_custom_call.1} parent=5 // pred_check_branch
        %231 = sbr.rel (%p229) target = $region40
      $region39: #{tpu_custom_call.1} parent=5 // pred_region
        // Predicated region
        $region41: #{tpu_custom_call.1} parent=39 // pred_check
          %p232 = pneg %p37
        $region42: #{tpu_custom_call.1} parent=39 // pred_check_branch
          %234 = sbr.rel (%p232) target = $region44
        $region43: #{tpu_custom_call.1} parent=39 // pred_region
          %p235 = scmp.lt.s32.totalorder %s17, 1
          %s236 = scalar_select %p235, %s17, 1
          %s237 = scalar_lea.vmem %s0, %s236
        $region44: #{tpu_custom_call.1} parent=39 // pred_fallthru
          _
      $region40: #{tpu_custom_call.1} parent=5 // pred_fallthru
        _
      %p238 = scmp.le.s32.totalorder 1, %s17
      %p239 = scmp.lt.s32.totalorder %s17, 3
      %p240 = pnand %p238, %p239
      %p241 = pneg %p240
      // Predicated region
      $region45: #{tpu_custom_call.1} parent=5 // pred_check
        _
      $region46: #{tpu_custom_call.1} parent=5 // pred_check_branch
        %243 = sbr.rel (%p240) target = $region48
      $region47: #{tpu_custom_call.1} parent=5 // pred_region
        %s244 = ssub.s32 %s17, 1
        %p245 = scmp.lt.s32.totalorder %s22, 1
        %s246 = scalar_select %p245, %s22, 1
        %s247 = scalar_lea.vmem %s0, %s246
        %p248 = pneg %p43
        %p249 = pneg %p40
        %p250 = pneg %p64
        %p251 = pneg %p61
        %p252 = pneg %p85
        %p253 = pneg %p82
        %p254 = pneg %p106
        %p255 = pneg %p103
        %p256 = pneg %p127
        %p257 = pneg %p124
        %p258 = pneg %p148
        %p259 = pneg %p145
        %p260 = pneg %p169
        %p261 = pneg %p166
        %p262 = pneg %p195
        %p263 = pneg %p192
        %s264 = sand.u32 %s182, 1
        %s265 = scalar_lea.sflag [#allocation4], %s264
        %s266 = sand.u32 %s182, 1
        %s267 = scalar_lea.vmem [#allocation3], %s266
        %p268 = scmp.lt.s32.totalorder %s22, 1
        %s269 = scalar_select %p268, %s22, 1
        %s270 = scalar_lea.vmem %s0, %s269
        %v271 = vld [vmem:[%s270] sm:$0x1]
        %v272 = vld [vmem:[%s1] sm:$0xff]
        %v273 = vld [vmem:[%s1 + $0x8] sm:$0xff]
        %v274 = vld [vmem:[%s1 + $0x10] sm:$0xff]
        %v275 = vld [vmem:[%s1 + $0x18] sm:$0xff]
        %v276 = vld [vmem:[%s1 + $0x20] sm:$0xff]
        %v277 = vld [vmem:[%s1 + $0x28] sm:$0xff]
        %v278 = vld [vmem:[%s1 + $0x30] sm:$0xff]
        %v279 = vld [vmem:[%s1 + $0x38] sm:$0xff]
        %281 = vset.pattern.permute.xlu0 0
        %282 = vperm.xlu0 %281, %v272
        %v283 = vpop.permute.xlu0 %282
        %286 = vset.pattern.permute.xlu0 0
        %287 = vperm.xlu0 %286, %v273
        %v288 = vpop.permute.xlu0 %287
        %291 = vset.pattern.permute.xlu0 0
        %292 = vperm.xlu0 %291, %v274
        %v293 = vpop.permute.xlu0 %292
        %296 = vset.pattern.permute.xlu0 0
        %297 = vperm.xlu0 %296, %v275
        %v298 = vpop.permute.xlu0 %297
        %301 = vset.pattern.permute.xlu0 0
        %302 = vperm.xlu0 %301, %v276
        %v303 = vpop.permute.xlu0 %302
        %306 = vset.pattern.permute.xlu0 0
        %307 = vperm.xlu0 %306, %v277
        %v308 = vpop.permute.xlu0 %307
        %311 = vset.pattern.permute.xlu0 0
        %312 = vperm.xlu0 %311, %v278
        %v313 = vpop.permute.xlu0 %312
        %316 = vset.pattern.permute.xlu0 0
        %317 = vperm.xlu0 %316, %v279
        %v318 = vpop.permute.xlu0 %317
        %v321 = vlaneseq
        %v322 = vshrl.u32 %v321, 7
        %v323 = vsub.s32 0, %v322
        %v324 = vrot.slane %v271, %v323
        %v326 = vmul.f32 %v283, %v324
        %v327 = vmul.f32 %v288, %v324
        %v328 = vmul.f32 %v293, %v324
        %v329 = vmul.f32 %v298, %v324
        %v330 = vmul.f32 %v303, %v324
        %v331 = vmul.f32 %v308, %v324
        %v332 = vmul.f32 %v313, %v324
        %v333 = vmul.f32 %v318, %v324
        %v334 = vld [vmem:[%s2] sm:$0xff]
        %v335 = vld [vmem:[%s2 + $0x8] sm:$0xff]
        %v336 = vld [vmem:[%s2 + $0x10] sm:$0xff]
        %v337 = vld [vmem:[%s2 + $0x18] sm:$0xff]
        %v338 = vld [vmem:[%s2 + $0x20] sm:$0xff]
        %v339 = vld [vmem:[%s2 + $0x28] sm:$0xff]
        %v340 = vld [vmem:[%s2 + $0x30] sm:$0xff]
        %v341 = vld [vmem:[%s2 + $0x38] sm:$0xff]
        %343 = vset.pattern.permute.xlu0 0
        %344 = vperm.xlu0 %343, %v334
        %v345 = vpop.permute.xlu0 %344
        %348 = vset.pattern.permute.xlu0 0
        %349 = vperm.xlu0 %348, %v335
        %v350 = vpop.permute.xlu0 %349
        %353 = vset.pattern.permute.xlu0 0
        %354 = vperm.xlu0 %353, %v336
        %v355 = vpop.permute.xlu0 %354
        %358 = vset.pattern.permute.xlu0 0
        %359 = vperm.xlu0 %358, %v337
        %v360 = vpop.permute.xlu0 %359
        %363 = vset.pattern.permute.xlu0 0
        %364 = vperm.xlu0 %363, %v338
        %v365 = vpop.permute.xlu0 %364
        %368 = vset.pattern.permute.xlu0 0
        %369 = vperm.xlu0 %368, %v339
        %v370 = vpop.permute.xlu0 %369
        %373 = vset.pattern.permute.xlu0 0
        %374 = vperm.xlu0 %373, %v340
        %v375 = vpop.permute.xlu0 %374
        %378 = vset.pattern.permute.xlu0 0
        %379 = vperm.xlu0 %378, %v341
        %v380 = vpop.permute.xlu0 %379
        %v382 = vadd.f32 %v326, %v345
        %v383 = vadd.f32 %v327, %v350
        %v384 = vadd.f32 %v328, %v355
        %v385 = vadd.f32 %v329, %v360
        %v386 = vadd.f32 %v330, %v365
        %v387 = vadd.f32 %v331, %v370
        %v388 = vadd.f32 %v332, %v375
        %v389 = vadd.f32 %v333, %v380
        %v390 = vmax.f32 %v382, 0.0
        %v391 = vmax.f32 %v383, 0.0
        %v392 = vmax.f32 %v384, 0.0
        %v393 = vmax.f32 %v385, 0.0
        %v394 = vmax.f32 %v386, 0.0
        %v395 = vmax.f32 %v387, 0.0
        %v396 = vmax.f32 %v388, 0.0
        %v397 = vmax.f32 %v389, 0.0
        %v398 = vld [vmem:[%s3] sm:$0xff]
        %v399 = vld [vmem:[%s3 + $0x8] sm:$0xff]
        %v400 = vld [vmem:[%s3 + $0x10] sm:$0xff]
        %v401 = vld [vmem:[%s3 + $0x18] sm:$0xff]
        %v402 = vld [vmem:[%s4] sm:$0xff]
        %v403 = vld [vmem:[%s4 + $0x8] sm:$0xff]
        %v404 = vld [vmem:[%s4 + $0x10] sm:$0xff]
        %v405 = vld [vmem:[%s4 + $0x18] sm:$0xff]
        %407 = vset.pattern.permute.xlu0 0
        %408 = vperm.xlu0 %407, %v402
        %v409 = vpop.permute.xlu0 %408
        %412 = vset.pattern.permute.xlu0 0
        %413 = vperm.xlu0 %412, %v403
        %v414 = vpop.permute.xlu0 %413
        %417 = vset.pattern.permute.xlu0 0
        %418 = vperm.xlu0 %417, %v404
        %v419 = vpop.permute.xlu0 %418
        %422 = vset.pattern.permute.xlu0 0
        %423 = vperm.xlu0 %422, %v405
        %v424 = vpop.permute.xlu0 %423
        %vm426 = vcmask 523264
        %v428 = vsel %vm426, %v398, 0
        %v431 = vsel %vm426, %v399, 0
        %v434 = vsel %vm426, %v400, 0
        %v437 = vsel %vm426, %v401, 0
        %439 = vmatprep.subr.mxu0 0.0
        %440 = vmatpush1.msra.mxu0 %v390
        %441 = vmatprep.subr.mxu0 0.0
        %442 = vmatpush1.msra.mxu0 %v391
        %443 = vmatprep.subr.mxu0 0.0
        %444 = vmatpush1.msra.mxu0 %v392
        %445 = vmatprep.subr.mxu0 0.0
        %446 = vmatpush1.msra.mxu0 %v393
        %447 = vmatprep.subr.mxu0 0.0
        %448 = vmatpush1.msra.mxu0 %v394
        %449 = vmatprep.subr.mxu0 0.0
        %450 = vmatpush1.msra.mxu0 %v395
        %451 = vmatprep.subr.mxu0 0.0
        %452 = vmatpush1.msra.mxu0 %v396
        %453 = vmatprep.subr.mxu0 0.0
        %454 = vmatpush1.msra.mxu0 %v397
        %455 = vmatprep.subr.mxu0 0.0
        %456 = vmatpush1.msra.mxu0 0.0
        %457 = vmatprep.subr.mxu0 0.0
        %458 = vmatpush1.msra.mxu0 0.0
        %459 = vmatprep.subr.mxu0 0.0
        %460 = vmatpush1.msra.mxu0 0.0
        %461 = vmatprep.subr.mxu0 0.0
        %462 = vmatpush1.msra.mxu0 0.0
        %463 = vmatprep.subr.mxu0 0.0
        %464 = vmatpush1.msra.mxu0 0.0
        %465 = vmatprep.subr.mxu0 0.0
        %466 = vmatpush1.msra.mxu0 0.0
        %467 = vmatprep.subr.mxu0 0.0
        %468 = vmatpush1.msra.mxu0 0.0
        %469 = vmatprep.subr.mxu0 0.0
        %470 = vmatpush1.msra.mxu0 0.0
        %471 = vmatprep.subr.mxu0 0.0
        %472 = vmatpush1.msra.mxu0 0.0
        %473 = vmatprep.subr.mxu0 0.0
        %474 = vmatpush1.msra.mxu0 0.0
        %475 = vmatprep.subr.mxu0 0.0
        %476 = vmatpush1.msra.mxu0 0.0
        %477 = vmatprep.subr.mxu0 0.0
        %478 = vmatpush1.msra.mxu0 0.0
        %479 = vmatprep.subr.mxu0 0.0
        %480 = vmatpush1.msra.mxu0 0.0
        %481 = vmatprep.subr.mxu0 0.0
        %482 = vmatpush1.msra.mxu0 0.0
        %483 = vmatprep.subr.mxu0 0.0
        %484 = vmatpush1.msra.mxu0 0.0
        %485 = vmatprep.subr.mxu0 0.0
        %486 = vmatpush1.msra.mxu0 0.0
        %487 = vmatprep.subr.mxu0 0.0
        %488 = vmatpush1.msra.mxu0 0.0
        %489 = vmatprep.subr.mxu0 0.0
        %490 = vmatpush1.msra.mxu0 0.0
        %491 = vmatprep.subr.mxu0 0.0
        %492 = vmatpush1.msra.mxu0 0.0
        %493 = vmatprep.subr.mxu0 0.0
        %494 = vmatpush1.msra.mxu0 0.0
        %495 = vmatprep.subr.mxu0 0.0
        %496 = vmatpush1.msra.mxu0 0.0
        %497 = vmatprep.subr.mxu0 0.0
        %498 = vmatpush1.msra.mxu0 0.0
        %499 = vmatprep.subr.mxu0 0.0
        %500 = vmatpush1.msra.mxu0 0.0
        %501 = vmatprep.subr.mxu0 0.0
        %502 = vmatpush1.msra.mxu0 0.0
        %503 = vmatprep.mubr.f32.mxu0 0.0
        %504 = vmatmul.mubr.f32.gmra.mrb[0].mxu0 %v428
        %v505 = vpop.f32.mrb[0].mxu0
        %v506 = vadd.f32 %v409, %v505
        %v507 = vpop.f32.mrb[0].mxu0
        %508 = vmatprep.mubr.f32.mxu0 0.0
        %509 = vmatmul.mubr.f32.gmra.mrb[0].mxu0 %v431
        %v510 = vpop.f32.mrb[0].mxu0
        %v511 = vadd.f32 %v414, %v510
        %v512 = vpop.f32.mrb[0].mxu0
        %513 = vmatprep.mubr.f32.mxu0 0.0
        %514 = vmatmul.mubr.f32.gmra.mrb[0].mxu0 %v434
        %v515 = vpop.f32.mrb[0].mxu0
        %v516 = vadd.f32 %v419, %v515
        %v517 = vpop.f32.mrb[0].mxu0
        %518 = vmatprep.mubr.f32.mxu0 0.0
        %519 = vmatmul.mubr.f32.gmra.mrb[0].mxu0 %v437
        %v520 = vpop.f32.mrb[0].mxu0
        %v521 = vadd.f32 %v424, %v520
        %v522 = vpop.f32.mrb[0].mxu0
        %523 = vdwg.mxu0
        %v524 = vmax.f32 %v506, 0.0
        %v525 = vmax.f32 %v511, 0.0
        %v526 = vmax.f32 %v516, 0.0
        %v527 = vmax.f32 %v521, 0.0
        %v528 = vld [vmem:[%s5] sm:$0xff]
        %v529 = vld [vmem:[%s5 + $0x8] sm:$0xff]
        %v530 = vld [vmem:[%s5 + $0x10] sm:$0xff]
        %v531 = vld [vmem:[%s5 + $0x18] sm:$0xff]
        %533 = vset.pattern.permute.xlu0 0
        %534 = vperm.xlu0 %533, %v528
        %v535 = vpop.permute.xlu0 %534
        %538 = vset.pattern.permute.xlu0 0
        %539 = vperm.xlu0 %538, %v529
        %v540 = vpop.permute.xlu0 %539
        %543 = vset.pattern.permute.xlu0 0
        %544 = vperm.xlu0 %543, %v530
        %v545 = vpop.permute.xlu0 %544
        %548 = vset.pattern.permute.xlu0 0
        %549 = vperm.xlu0 %548, %v531
        %v550 = vpop.permute.xlu0 %549
        %v552 = vmul.f32 %v535, %v524
        %v553 = vmul.f32 %v540, %v525
        %v554 = vmul.f32 %v545, %v526
        %v555 = vmul.f32 %v550, %v527
        %v556 = vadd.f32 %v552, %v553
        %v557 = vadd.f32 %v556, %v554
        %v558 = vadd.f32 %v557, %v555
        %v559 = vrot.slane %v558, 4
        %v560 = vadd.f32 %v558, %v559
        %v561 = vrot.slane %v560, 2
        %v562 = vadd.f32 %v560, %v561
        %v563 = vrot.slane %v562, 1
        %v564 = vadd.f32 %v562, %v563
        %s565 = sld [smem:[#allocation2]]
        %v566 = vstv %s565
        %v567 = vadd.f32 %v564, %v566
        %568 = vst [vmem:[%s267] sm:$0x1] %v567
        %s569 = sand.u32 %s182, 1
        %s570 = scalar_lea.sflag [#allocation4], %s569
        %s571 = sand.u32 %s182, 1
        %s572 = scalar_lea.vmem [#allocation3], %s571
        // Predicated region
        $region49: #{tpu_custom_call.1} parent=47 // pred_check
          %p573 = pneg %p192
        $region50: #{tpu_custom_call.1} parent=47 // pred_check_branch
          %575 = sbr.rel (%p573) target = $region52
        $region51: #{tpu_custom_call.1} parent=47 // pred_region
          %s577 = ssub.s32 16, 16
          %578 = vsyncadd %s570, %s577
          %s579 = smul.addr %s22, 16
          %s580 = scalar_lea.hbm %s7, %s579
          %s582 = sshll.u32 %s572, 4
          %s583 = int_to_ptr.vmem [resolvable:$true] %s582
          %585 = dma.vmem_to_hbm [thread:$0]  %s583, 16, %s580, %s570
        $region52: #{tpu_custom_call.1} parent=47 // pred_fallthru
          _
      $region48: #{tpu_custom_call.1} parent=5 // pred_fallthru
        _
      %p586 = scmp.le.s32.totalorder 2, %s17
      // Predicated region
      $region53: #{tpu_custom_call.1} parent=5 // pred_check
        %p587 = pneg %p586
      $region54: #{tpu_custom_call.1} parent=5 // pred_check_branch
        %589 = sbr.rel (%p587) target = $region56
      $region55: #{tpu_custom_call.1} parent=5 // pred_region
        %s590 = ssub.s32 %s17, 2
        // Predicated region
        $region57: #{tpu_custom_call.1} parent=55 // pred_check
          %p591 = pneg %p198
        $region58: #{tpu_custom_call.1} parent=55 // pred_check_branch
          %593 = sbr.rel (%p591) target = $region60
        $region59: #{tpu_custom_call.1} parent=55 // pred_region
          %s594 = sand.u32 %s183, 1
          %s595 = scalar_lea.sflag [#allocation4], %s594
          %s596 = sand.u32 %s183, 1
          %s597 = scalar_lea.vmem [#allocation3], %s596
          %598 = dma.done %s595, 16
        $region60: #{tpu_custom_call.1} parent=55 // pred_fallthru
          _
      $region56: #{tpu_custom_call.1} parent=5 // pred_fallthru
        _
    $region6: #{tpu_custom_call.1} parent=1 // loop_footer
      %s21 = sadd.s32 1, %s17
    $region7: #{tpu_custom_call.1} parent=1 // loop_footer_branch
      %16 = sbr.rel target = $region3
    $region8: #{tpu_custom_call.1} parent=1 // loop_exit
      _
    %599 = vsyncpa [#allocation4], 1
    %s600 = scalar_lea.sflag [#allocation4], 1
    %601 = vsyncpa %s600, 1

</llo_original>
